<compile_context>
chip_gen: v7x
topology: tpu7x:2x2x1
jax: 0.10.0
libtpu: 0.0.40
codegen_flags: <defaults>
</compile_context>

<pallas_src>
import jax
import jax.numpy as jnp
import numpy as np
from jax.experimental import pallas as pl
from jax.experimental.pallas import tpu as pltpu

BN_EPS = 1e-5
MAX_TN = 2048            # lane-dense tile cap (multiple of 128)
HIGH = jax.lax.Precision.HIGHEST


def _affine_relu_kernel(x_ref, w_ref, b_ref, o_ref):
    # x_ref: (3, TN)   input tile (batch dim squeezed), N lane-dense
    # w_ref: (C, 3)    BN-folded conv weights (resident across the grid)
    # b_ref: (C, 1)    BN-folded bias          (resident across the grid)
    # o_ref: (C, TN)   output tile
    y = jnp.dot(w_ref[...], x_ref[...],
                preferred_element_type=jnp.float32, precision=HIGH)   # MXU
    y = y + b_ref[...]                                                # VPU
    o_ref[...] = jnp.maximum(y, jnp.float32(0.0)).astype(o_ref.dtype)


def _choose_tile(n, b):
    """Largest lane-dense tile (<= MAX_TN); split the n-axis when B == 1 so the
    v7x megacore has >= 2 iterations on a parallel axis."""
    n_ceil = pl.cdiv(n, 128) * 128
    tn = min(MAX_TN, n_ceil)
    if b == 1 and n > 128:
        tn = min(tn, pl.cdiv(pl.cdiv(n, 2), 128) * 128)
    return tn


def positional_encoding(xyz, w, bias, gamma, beta, *, out_dtype=jnp.float32):
    """xyz: (B, N, 3). Returns relu(BN(conv1d(xyz^T))) as (B, C, N) (NCL)."""
    B, N, _ = xyz.shape
    C = w.shape[0]
    x32 = xyz.astype(jnp.float32)

    # ---- Stage 1: analytic training-mode BN stats, straight from xyz ----
    cnt = jnp.float32(B * N)
    mean_x = jnp.sum(x32, axis=(0, 1)) / cnt                          # (3,)
    xc = x32 - mean_x
    cov_x = jnp.einsum('bni,bnj->ij', xc, xc, precision=HIGH) / cnt   # (3,3) biased
    mean_z = jnp.einsum('ci,i->c', w, mean_x, precision=HIGH) + bias  # (C,)
    var_z = jnp.einsum('ci,ij,cj->c', w, cov_x, w, precision=HIGH)    # (C,)
    var_z = jnp.maximum(var_z, 0.0)                                   # rounding guard

    a = gamma * jax.lax.rsqrt(var_z + BN_EPS)                         # (C,)
    w_fold = a[:, None] * w                                           # (C, 3)
    b_fold = (a * (bias - mean_z) + beta).reshape(C, 1)               # (C, 1)

    # Transposed NCL input, produced once and consumed only by the kernel.
    xt = jnp.transpose(x32, (0, 2, 1))                                # (B, 3, N)

    # ---- Stage 2: tiled streaming affine + ReLU ----
    TN = _choose_tile(N, B)
    grid = (B, pl.cdiv(N, TN))

    out = pl.pallas_call(
        _affine_relu_kernel,
        out_shape=jax.ShapeDtypeStruct((B, C, N), out_dtype),
        grid=grid,
        in_specs=[
            pl.BlockSpec((pl.Squeezed(), 3, TN), lambda b, n: (b, 0, n)),
            pl.BlockSpec((C, 3), lambda b, n: (0, 0)),
            pl.BlockSpec((C, 1), lambda b, n: (0, 0)),
        ],
        out_specs=pl.BlockSpec((pl.Squeezed(), C, TN), lambda b, n: (b, 0, n)),
        compiler_params=pltpu.CompilerParams(
            dimension_semantics=("parallel", "parallel"),
            vmem_limit_bytes=32 * 1024 * 1024),   # fits v7x's smaller VMEM
    )(xt, w_fold, b_fold)
    return out


def positional_encoding_ref(xyz, w, bias, gamma, beta):
    """Pure-JAX reference of the PyTorch forward (training-mode BN)."""
    xt = jnp.transpose(xyz, (0, 2, 1)).astype(jnp.float32)            # (B, 3, N)
    z = jnp.einsum('ci,bin->bcn', w, xt, precision=HIGH) + bias[None, :, None]
    mean = jnp.mean(z, axis=(0, 2), keepdims=True)
    var = jnp.mean((z - mean) ** 2, axis=(0, 2), keepdims=True)
    y = (z - mean) * jax.lax.rsqrt(var + BN_EPS)
    y = y * gamma[None, :, None] + beta[None, :, None]
    return jnp.maximum(y, 0.0)


if __name__ == "__main__":
    B, N, C = 2, 200, 32   # N not a multiple of 128 -> exercises the ragged last tile

    key = jax.random.PRNGKey(0)
    k_x, k_w, k_b, k_g, k_beta = jax.random.split(key, 5)

    xyz = jax.random.normal(k_x, (B, N, 3), dtype=jnp.float32)

    # Synthetic params; shapes match nn.Conv1d(3, C, 1) (weight squeezed) + BatchNorm1d(C).
    w = jax.random.normal(k_w, (C, 3), dtype=jnp.float32) * 0.5
    bias = jax.random.normal(k_b, (C,), dtype=jnp.float32) * 0.1
    gamma = 1.0 + 0.1 * jax.random.normal(k_g, (C,), dtype=jnp.float32)
    beta = 0.1 * jax.random.normal(k_beta, (C,), dtype=jnp.float32)

    out = jax.block_until_ready(positional_encoding(xyz, w, bias, gamma, beta))
    ref = jax.block_until_ready(positional_encoding_ref(xyz, w, bias, gamma, beta))

    np.testing.assert_allclose(np.asarray(out), np.asarray(ref), rtol=5e-4, atol=1e-5)
    assert out.shape == (B, C, N) and out.dtype == jnp.float32
    print("KERNEL_OK")
</pallas_src>

<mosaic_0001>
module attributes {stable_mosaic.version = 11 : i64} {
  func.func @_affine_relu_kernel(%arg0: i32, %arg1: i32, %arg2: memref<1x3x256xf32, #tpu.memory_space<vmem>>, %arg3: memref<32x3xf32, #tpu.memory_space<vmem>>, %arg4: memref<32x1xf32, #tpu.memory_space<vmem>>, %arg5: memref<1x32x256xf32, #tpu.memory_space<vmem>>) attributes {dimension_semantics = [#tpu.dimension_semantics<parallel>, #tpu.dimension_semantics<parallel>], iteration_bounds = array<i64: 2, 1>, scalar_prefetch = 0 : i64, scratch_operands = 0 : i64, tpu.core_type = #tpu.core_type<tc>, window_params = [{transform_indices = @transform_0, window_bounds = array<i64: 1, 3, 256>}, {pipeline_mode = #tpu.pipeline_mode<synchronous>, transform_indices = @transform_1, window_bounds = array<i64: 32, 3>}, {pipeline_mode = #tpu.pipeline_mode<synchronous>, transform_indices = @transform_2, window_bounds = array<i64: 32, 1>}, {transform_indices = @transform_3, window_bounds = array<i64: 1, 32, 256>}]} {
    %c0 = arith.constant 0 : index
    %c0_0 = arith.constant 0 : index
    %0 = vector.load %arg3[%c0, %c0_0] : memref<32x3xf32, #tpu.memory_space<vmem>>, vector<32x3xf32>
    %c0_1 = arith.constant 0 : index
    %c0_2 = arith.constant 0 : index
    %c0_3 = arith.constant 0 : index
    %1 = vector.load %arg2[%c0_1, %c0_2, %c0_3] : memref<1x3x256xf32, #tpu.memory_space<vmem>>, vector<1x3x256xf32>
    %2 = vector.shape_cast %1 : vector<1x3x256xf32> to vector<3x256xf32>
    %cst = arith.constant dense<0.000000e+00> : vector<32x256xf32>
    %3 = tpu.matmul %0, %2, %cst {dimension_numbers = #tpu.dot_dimension_numbers<[1], [0], [0], [1], [0, 0, 1, 1], [], []>, precision = #tpu.contract_precision<fp32>} : vector<32x3xf32>, vector<3x256xf32>, vector<32x256xf32> -> vector<32x256xf32>
    %c0_4 = arith.constant 0 : index
    %c0_5 = arith.constant 0 : index
    %4 = vector.load %arg4[%c0_4, %c0_5] : memref<32x1xf32, #tpu.memory_space<vmem>>, vector<32x1xf32>
    %5 = vector.broadcast %4 : vector<32x1xf32> to vector<32x256xf32>
    %6 = arith.addf %3, %5 : vector<32x256xf32>
    %cst_6 = arith.constant 0.000000e+00 : f32
    %7 = vector.broadcast %cst_6 : f32 to vector<32x256xf32>
    %8 = arith.maximumf %6, %7 : vector<32x256xf32>
    %c0_7 = arith.constant 0 : index
    %c0_8 = arith.constant 0 : index
    %c0_9 = arith.constant 0 : index
    %9 = vector.load %arg5[%c0_7, %c0_8, %c0_9] : memref<1x32x256xf32, #tpu.memory_space<vmem>>, vector<1x32x256xf32>
    %10 = vector.shape_cast %9 : vector<1x32x256xf32> to vector<32x256xf32>
    %11 = vector.shape_cast %8 : vector<32x256xf32> to vector<1x32x256xf32>
    tpu.vector_store %arg5[%c0_7, %c0_8, %c0_9], %11 {strides = array<i32>} : memref<1x32x256xf32, #tpu.memory_space<vmem>>, vector<1x32x256xf32>,
    return
  }
  func.func @transform_0(%arg0: i32, %arg1: i32) -> (i32, i32, i32) {
    %c0_i32 = arith.constant 0 : i32
    %c0_i32_0 = arith.constant 0 : i32
    return %arg0, %c0_i32, %arg1 : i32, i32, i32
  }
  func.func @transform_1(%arg0: i32, %arg1: i32) -> (i32, i32) {
    %c0_i32 = arith.constant 0 : i32
    %c0_i32_0 = arith.constant 0 : i32
    %c0_i32_1 = arith.constant 0 : i32
    return %c0_i32, %c0_i32_0 : i32, i32
  }
  func.func @transform_2(%arg0: i32, %arg1: i32) -> (i32, i32) {
    %c0_i32 = arith.constant 0 : i32
    %c0_i32_0 = arith.constant 0 : i32
    %c0_i32_1 = arith.constant 0 : i32
    return %c0_i32, %c0_i32_0 : i32, i32
  }
  func.func @transform_3(%arg0: i32, %arg1: i32) -> (i32, i32, i32) {
    %c0_i32 = arith.constant 0 : i32
    %c0_i32_0 = arith.constant 0 : i32
    return %arg0, %c0_i32, %arg1 : i32, i32, i32
  }
}

</mosaic_0001>

<llo_original>
// kernel: tpu_custom_call.1
$region0: #{tpu_custom_call.1}
  #allocation0 [shape = 'u32[]', space=smem, size = 0x4, offset = 0x4, fixed_abs, tag = 'smem constant byte address 0x4 - core index']
  #allocation1 [shape = 'u32[144,128]{1,0:T(1,128)}', space=vmem, size = 0x12000, scoped, tag = 'internal scratch']
  %s0 = inlined_call_operand.vmem [shape: f32[2,3,200], index: 0, kind: input, shape index: {}]
  %s1 = inlined_call_operand.vmem [shape: f32[32,3], index: 1, kind: input, shape index: {}]
  %s2 = inlined_call_operand.vmem [shape: f32[32,1], index: 2, kind: input, shape index: {}]
  %s3 = inlined_call_operand.hbm [shape: f32[2,32,200], index: 3, kind: output, shape index: {}]
  %s4 = sld [smem:[#allocation0]]
  $region45: #{tpu_custom_call.1} parent=0
    _
  %s6 = ssub.s32 1, %s4
  %s7 = scalar_select 0, %s6, %s4
  $region1: #{tpu_custom_call.1} parent=0
    #allocation2 [shape = 'u8[65536]{0}', space=vmem, size = 0x10000, scoped, tag = 'output window, operand 0']
    #allocation3 [shape = 's32[2]{0}', space=sflag, size = 0x8, scoped, tag = 'scoped memory for tpu_custom_call.1']
    %8 = vsyncpa [#allocation3], 0
    %s9 = scalar_lea.sflag [#allocation3], 1
    %10 = vsyncpa %s9, 0
    loop: start=0, step=1, limit=4
    $region2: #{tpu_custom_call.1} parent=1 // loop_pre_header
      _
    $region3: #{tpu_custom_call.1} parent=1 // loop_header
      %s12 = sphi 0, %s16
      %p13 = scmp.ge.s32.totalorder %s12, 4
      %s19 = sphi 0, %s31
      %s20 = sphi 0, %s27
      %s21 = sphi 0, %s19
      %s22 = sphi 0, %s20
      %s23 = sphi 0, %s21
      %s24 = sphi 0, %s22
      %s36 = sphi 0, %s38
      %s39 = sphi 0, %s36
      %s40 = sphi 0, %s39
      %s56 = sphi 0, %s40
      %s60 = sphi 0, %s60
      %s62 = sphi 0, %s60
      %s63 = sphi 0, %s62
      %s77 = sphi 0, %s63
      %s81 = sphi 0, %s81
      %s83 = sphi 0, %s81
      %s84 = sphi 0, %s83
      %s98 = sphi 0, %s84
      %s106 = sphi 0, %s108
      %s109 = sphi 0, %s106
      %s110 = sphi 0, %s109
      %s126 = sphi 0, %s110
    $region4: #{tpu_custom_call.1} parent=1 // loop_header_branch
      %15 = sbr.rel (%p13) target = $region8
    $region5: #{tpu_custom_call.1} parent=1 // loop_body
      %s17 = ssub.s32 %s12, 1
      %s18 = ssub.s32 %s12, 2
      %s25 = sadd.s32 1, %s20
      %p26 = scmp.ge.s32.totalorder %s25, 1
      %s27 = scalar_select %p26, 0, %s25
      %s28 = sadd.s32 1, %s19
      %s29 = scalar_select %p26, %s28, %s19
      %p30 = scmp.ge.s32.totalorder %s29, 2
      %s31 = scalar_select %p30, 0, %s29
      %s32 = ssub.s32 %s19, %s31
      %s33 = ssub.s32 %s20, %s27
      %s34 = sor.u32 %s32, %s33
      %p35 = scmp.eq.s32.totalorder %s34, 0
      %s37 = sadd.s32 %s36, 1
      %s38 = scalar_select %p35, %s36, %s37
      %p41 = pneg %p35
      %p42 = scmp.eq.s32.totalorder %s12, 1
      %p43 = por %p41, %p42
      %p44 = scmp.ne.s32.totalorder %s36, %s39
      %p45 = scmp.eq.s32.totalorder %s12, 0
      %p46 = por %p44, %p45
      %p47 = scmp.ne.s32.totalorder %s36, %s39
      %p48 = scmp.eq.s32.totalorder %s17, 1
      %p49 = por %p47, %p48
      %p50 = scmp.ne.s32.totalorder %s39, %s40
      %p51 = scmp.eq.s32.totalorder %s17, 0
      %p52 = por %p50, %p51
      %p53 = scmp.ne.s32.totalorder %s39, %s40
      %p54 = scmp.eq.s32.totalorder %s18, 1
      %p55 = por %p53, %p54
      %p57 = scmp.ne.s32.totalorder %s40, %s56
      %p58 = scmp.eq.s32.totalorder %s18, 0
      %p59 = por %p57, %p58
      %s61 = sadd.s32 %s60, 1
      %p64 = scmp.eq.s32.totalorder %s12, 1
      %p65 = scmp.ne.s32.totalorder %s60, %s62
      %p66 = scmp.eq.s32.totalorder %s12, 0
      %p67 = por %p65, %p66
      %p68 = scmp.ne.s32.totalorder %s60, %s62
      %p69 = scmp.eq.s32.totalorder %s17, 1
      %p70 = por %p68, %p69
      %p71 = scmp.ne.s32.totalorder %s62, %s63
      %p72 = scmp.eq.s32.totalorder %s17, 0
      %p73 = por %p71, %p72
      %p74 = scmp.ne.s32.totalorder %s62, %s63
      %p75 = scmp.eq.s32.totalorder %s18, 1
      %p76 = por %p74, %p75
      %p78 = scmp.ne.s32.totalorder %s63, %s77
      %p79 = scmp.eq.s32.totalorder %s18, 0
      %p80 = por %p78, %p79
      %s82 = sadd.s32 %s81, 1
      %p85 = scmp.eq.s32.totalorder %s12, 1
      %p86 = scmp.ne.s32.totalorder %s81, %s83
      %p87 = scmp.eq.s32.totalorder %s12, 0
      %p88 = por %p86, %p87
      %p89 = scmp.ne.s32.totalorder %s81, %s83
      %p90 = scmp.eq.s32.totalorder %s17, 1
      %p91 = por %p89, %p90
      %p92 = scmp.ne.s32.totalorder %s83, %s84
      %p93 = scmp.eq.s32.totalorder %s17, 0
      %p94 = por %p92, %p93
      %p95 = scmp.ne.s32.totalorder %s83, %s84
      %p96 = scmp.eq.s32.totalorder %s18, 1
      %p97 = por %p95, %p96
      %p99 = scmp.ne.s32.totalorder %s84, %s98
      %p100 = scmp.eq.s32.totalorder %s18, 0
      %p101 = por %p99, %p100
      %s102 = ssub.s32 %s19, %s31
      %s103 = ssub.s32 %s20, %s27
      %s104 = sor.u32 %s102, %s103
      %p105 = scmp.eq.s32.totalorder %s104, 0
      %s107 = sadd.s32 %s106, 1
      %s108 = scalar_select %p105, %s106, %s107
      %p111 = pneg %p105
      %p112 = scmp.eq.s32.totalorder %s12, 1
      %p113 = por %p111, %p112
      %p114 = scmp.ne.s32.totalorder %s106, %s109
      %p115 = scmp.eq.s32.totalorder %s12, 0
      %p116 = por %p114, %p115
      %p117 = scmp.ne.s32.totalorder %s106, %s109
      %p118 = scmp.eq.s32.totalorder %s17, 1
      %p119 = por %p117, %p118
      %p120 = scmp.ne.s32.totalorder %s109, %s110
      %p121 = scmp.eq.s32.totalorder %s17, 0
      %p122 = por %p120, %p121
      %p123 = scmp.ne.s32.totalorder %s109, %s110
      %p124 = scmp.eq.s32.totalorder %s18, 1
      %p125 = por %p123, %p124
      %p127 = scmp.ne.s32.totalorder %s110, %s126
      %p128 = scmp.eq.s32.totalorder %s18, 0
      %p129 = por %p127, %p128
      %p130 = scmp.le.s32.totalorder 1, %s12
      %p131 = scmp.lt.s32.totalorder %s12, 3
      %p132 = pnand %p130, %p131
      %p133 = pneg %p132
      // Predicated region
      $region9: #{tpu_custom_call.1} parent=5 // pred_check
        _
      $region10: #{tpu_custom_call.1} parent=5 // pred_check_branch
        %135 = sbr.rel (%p132) target = $region12
      $region11: #{tpu_custom_call.1} parent=5 // pred_region
        %s136 = ssub.s32 %s12, 1
        // Predicated region
        $region13: #{tpu_custom_call.1} parent=11 // pred_check
          %p137 = pneg %p73
        $region14: #{tpu_custom_call.1} parent=11 // pred_check_branch
          %139 = sbr.rel (%p137) target = $region16
        $region15: #{tpu_custom_call.1} parent=11 // pred_region
          _
        $region16: #{tpu_custom_call.1} parent=11 // pred_fallthru
          _
        // Predicated region
        $region17: #{tpu_custom_call.1} parent=11 // pred_check
          %p140 = pneg %p94
        $region18: #{tpu_custom_call.1} parent=11 // pred_check_branch
          %142 = sbr.rel (%p140) target = $region20
        $region19: #{tpu_custom_call.1} parent=11 // pred_region
          _
        $region20: #{tpu_custom_call.1} parent=11 // pred_fallthru
          _
      $region12: #{tpu_custom_call.1} parent=5 // pred_fallthru
        _
      %p143 = scmp.lt.s32.totalorder %s12, 2
      // Predicated region
      $region21: #{tpu_custom_call.1} parent=5 // pred_check
        %p144 = pneg %p143
      $region22: #{tpu_custom_call.1} parent=5 // pred_check_branch
        %146 = sbr.rel (%p144) target = $region24
      $region23: #{tpu_custom_call.1} parent=5 // pred_region
        // Predicated region
        $region25: #{tpu_custom_call.1} parent=23 // pred_check
          %p147 = pneg %p46
        $region26: #{tpu_custom_call.1} parent=23 // pred_check_branch
          %149 = sbr.rel (%p147) target = $region28
        $region27: #{tpu_custom_call.1} parent=23 // pred_region
          %s150 = smul.u32 2, %s20
          %p151 = scmp.lt.s32.totalorder %s19, 1
          %s152 = scalar_select %p151, %s19, 1
          %p153 = scmp.lt.s32.totalorder %s150, 1
          %s154 = scalar_select %p153, %s150, 1
          %s155 = smul.addr %s152, 2
          %s156 = sadd.s32 %s154, %s155
          %s157 = smul.addr %s156, 4
          %s158 = scalar_lea.vmem %s0, %s157
          %s159 = smul.u32 2, %s20
        $region28: #{tpu_custom_call.1} parent=23 // pred_fallthru
          _
      $region24: #{tpu_custom_call.1} parent=5 // pred_fallthru
        _
      %p160 = scmp.le.s32.totalorder 1, %s12
      %p161 = scmp.lt.s32.totalorder %s12, 3
      %p162 = pnand %p160, %p161
      %p163 = pneg %p162
      // Predicated region
      $region29: #{tpu_custom_call.1} parent=5 // pred_check
        _
      $region30: #{tpu_custom_call.1} parent=5 // pred_check_branch
        %165 = sbr.rel (%p162) target = $region32
      $region31: #{tpu_custom_call.1} parent=5 // pred_region
        %s166 = ssub.s32 %s12, 1
        %s167 = smul.u32 2, %s22
        %p168 = scmp.lt.s32.totalorder %s21, 1
        %s169 = scalar_select %p168, %s21, 1
        %p170 = scmp.lt.s32.totalorder %s167, 1
        %s171 = scalar_select %p170, %s167, 1
        %s172 = smul.addr %s169, 2
        %s173 = sadd.s32 %s171, %s172
        %s174 = smul.addr %s173, 4
        %s175 = scalar_lea.vmem %s0, %s174
        %p176 = pneg %p52
        %p177 = pneg %p49
        %p178 = pneg %p73
        %p179 = pneg %p70
        %p180 = pneg %p94
        %p181 = pneg %p91
        %p182 = pneg %p122
        %p183 = pneg %p119
        %s184 = sand.u32 %s109, 1
        %s185 = scalar_lea.sflag [#allocation3], %s184
        %s186 = sand.u32 %s109, 1
        %s187 = smul.addr %s186, 64
        %s188 = scalar_lea.vmem [#allocation2], %s187
        %s189 = smul.u32 2, %s22
        %p190 = scmp.lt.s32.totalorder %s21, 1
        %s191 = scalar_select %p190, %s21, 1
        %p192 = scmp.lt.s32.totalorder %s189, 1
        %s193 = scalar_select %p192, %s189, 1
        %s194 = smul.addr %s191, 2
        %s195 = sadd.s32 %s193, %s194
        %s196 = smul.addr %s195, 4
        %s197 = scalar_lea.vmem %s0, %s196
        %s198 = smul.u32 2, %s22
        %s199 = smul.u32 2, %s22
        %v200 = vld [vmem:[%s1] sm:$0xff]
        %v201 = vld [vmem:[%s1 + $0x8] sm:$0xff]
        %v202 = vld [vmem:[%s1 + $0x10] sm:$0xff]
        %v203 = vld [vmem:[%s1 + $0x18] sm:$0xff]
        %v204 = vld [vmem:[%s197] sm:$0x77]
        %v205 = vld [vmem:[%s2] sm:$0xff]
        %v206 = vld [vmem:[%s2 + $0x8] sm:$0xff]
        %v207 = vld [vmem:[%s2 + $0x10] sm:$0xff]
        %v208 = vld [vmem:[%s2 + $0x18] sm:$0xff]
        %210 = vset.pattern.permute.xlu0 0
        %211 = vperm.xlu0 %210, %v205
        %v212 = vpop.permute.xlu0 %211
        %215 = vset.pattern.permute.xlu0 0
        %216 = vperm.xlu0 %215, %v206
        %v217 = vpop.permute.xlu0 %216
        %220 = vset.pattern.permute.xlu0 0
        %221 = vperm.xlu0 %220, %v207
        %v222 = vpop.permute.xlu0 %221
        %225 = vset.pattern.permute.xlu0 0
        %226 = vperm.xlu0 %225, %v208
        %v227 = vpop.permute.xlu0 %226
        %v230 = vcombine.high %v204, %v204
        %vm231 = vcmask 23552
        %v233 = vsel %vm231, %v200, 0
        %v236 = vsel %vm231, %v201, 0
        %v239 = vsel %vm231, %v202, 0
        %v242 = vsel %vm231, %v203, 0
        %vm244 = vcmask 1042432
        %v245 = vsel %vm244, %v204, 0
        %v247 = vsel %vm244, %v230, 0
        %v249 = vand.u32 %v247, 4294901760
        %250 = vmatprep.subr.mxu0 %v249
        %v251 = vand.u32 %v245, 4294901760
        %252 = vmatpush1.msra.mxu0 %v251
        %253 = vmatprep.subr.mxu0 0.0
        %254 = vmatpush1.msra.mxu0 0.0
        %255 = vmatprep.subr.mxu0 0.0
        %256 = vmatpush1.msra.mxu0 0.0
        %257 = vmatprep.subr.mxu0 0.0
        %258 = vmatpush1.msra.mxu0 0.0
        %259 = vmatprep.subr.mxu0 0.0
        %260 = vmatpush1.msra.mxu0 0.0
        %261 = vmatprep.subr.mxu0 0.0
        %262 = vmatpush1.msra.mxu0 0.0
        %263 = vmatprep.subr.mxu0 0.0
        %264 = vmatpush1.msra.mxu0 0.0
        %265 = vmatprep.subr.mxu0 0.0
        %266 = vmatpush1.msra.mxu0 0.0
        %267 = vmatprep.subr.mxu0 0.0
        %268 = vmatpush1.msra.mxu0 0.0
        %269 = vmatprep.subr.mxu0 0.0
        %270 = vmatpush1.msra.mxu0 0.0
        %271 = vmatprep.subr.mxu0 0.0
        %272 = vmatpush1.msra.mxu0 0.0
        %273 = vmatprep.subr.mxu0 0.0
        %274 = vmatpush1.msra.mxu0 0.0
        %275 = vmatprep.subr.mxu0 0.0
        %276 = vmatpush1.msra.mxu0 0.0
        %277 = vmatprep.subr.mxu0 0.0
        %278 = vmatpush1.msra.mxu0 0.0
        %279 = vmatprep.subr.mxu0 0.0
        %280 = vmatpush1.msra.mxu0 0.0
        %281 = vmatprep.subr.mxu0 0.0
        %282 = vmatpush1.msra.mxu0 0.0
        %283 = vmatprep.subr.mxu0 0.0
        %284 = vmatpush1.msra.mxu0 0.0
        %285 = vmatprep.subr.mxu0 0.0
        %286 = vmatpush1.msra.mxu0 0.0
        %287 = vmatprep.subr.mxu0 0.0
        %288 = vmatpush1.msra.mxu0 0.0
        %289 = vmatprep.subr.mxu0 0.0
        %290 = vmatpush1.msra.mxu0 0.0
        %291 = vmatprep.subr.mxu0 0.0
        %292 = vmatpush1.msra.mxu0 0.0
        %293 = vmatprep.subr.mxu0 0.0
        %294 = vmatpush1.msra.mxu0 0.0
        %295 = vmatprep.subr.mxu0 0.0
        %296 = vmatpush1.msra.mxu0 0.0
        %297 = vmatprep.subr.mxu0 0.0
        %298 = vmatpush1.msra.mxu0 0.0
        %299 = vmatprep.subr.mxu0 0.0
        %300 = vmatpush1.msra.mxu0 0.0
        %301 = vmatprep.subr.mxu0 0.0
        %302 = vmatpush1.msra.mxu0 0.0
        %303 = vmatprep.subr.mxu0 0.0
        %304 = vmatpush1.msra.mxu0 0.0
        %305 = vmatprep.subr.mxu0 0.0
        %306 = vmatpush1.msra.mxu0 0.0
        %307 = vmatprep.subr.mxu0 0.0
        %308 = vmatpush1.msra.mxu0 0.0
        %309 = vmatprep.subr.mxu0 0.0
        %310 = vmatpush1.msra.mxu0 0.0
        %311 = vmatprep.subr.mxu0 0.0
        %312 = vmatpush1.msra.mxu0 0.0
        %313 = vmatprep.subr.mxu0 0.0
        %314 = vmatpush1.msra.mxu0 0.0
        %315 = vmatprep.mubr.f32.mxu0 0.0
        %v316 = vand.u32 %v233, 4294901760
        %v317 = vsub.f32 %v233, %v316
        %v318 = vand.u32 %v317, 4294901760
        %v319 = vsub.f32 %v317, %v318
        %v320 = vand.u32 %v319, 4294901760
        %321 = vmatmul.mubr.f32.gmra.mrb[0].mxu0 %v320
        %v322 = vpop.f32.mrb[0].mxu0
        %v323 = vadd.f32 %v212, %v322
        %v324 = vpop.f32.mrb[0].mxu0
        %v325 = vadd.f32 %v212, %v324
        %326 = vmatprep.mubr.f32.mxu0 0.0
        %v327 = vand.u32 %v236, 4294901760
        %v328 = vsub.f32 %v236, %v327
        %v329 = vand.u32 %v328, 4294901760
        %v330 = vsub.f32 %v328, %v329
        %v331 = vand.u32 %v330, 4294901760
        %332 = vmatmul.mubr.f32.gmra.mrb[0].mxu0 %v331
        %v333 = vpop.f32.mrb[0].mxu0
        %v334 = vadd.f32 %v217, %v333
        %v335 = vpop.f32.mrb[0].mxu0
        %v336 = vadd.f32 %v217, %v335
        %337 = vmatprep.mubr.f32.mxu0 0.0
        %v338 = vand.u32 %v239, 4294901760
        %v339 = vsub.f32 %v239, %v338
        %v340 = vand.u32 %v339, 4294901760
        %v341 = vsub.f32 %v339, %v340
        %v342 = vand.u32 %v341, 4294901760
        %343 = vmatmul.mubr.f32.gmra.mrb[0].mxu0 %v342
        %v344 = vpop.f32.mrb[0].mxu0
        %v345 = vadd.f32 %v222, %v344
        %v346 = vpop.f32.mrb[0].mxu0
        %v347 = vadd.f32 %v222, %v346
        %348 = vmatprep.mubr.f32.mxu0 0.0
        %v349 = vand.u32 %v242, 4294901760
        %v350 = vsub.f32 %v242, %v349
        %v351 = vand.u32 %v350, 4294901760
        %v352 = vsub.f32 %v350, %v351
        %v353 = vand.u32 %v352, 4294901760
        %354 = vmatmul.mubr.f32.gmra.mrb[0].mxu0 %v353
        %v355 = vpop.f32.mrb[0].mxu0
        %v356 = vadd.f32 %v227, %v355
        %v357 = vpop.f32.mrb[0].mxu0
        %v358 = vadd.f32 %v227, %v357
        %359 = vdwg.mxu0
        %v360 = vand.u32 %v247, 4294901760
        %v361 = vsub.f32 %v247, %v360
        %v362 = vand.u32 %v361, 4294901760
        %v363 = vsub.f32 %v361, %v362
        %v364 = vand.u32 %v363, 4294901760
        %365 = vmatprep.subr.mxu0 %v364
        %v366 = vand.u32 %v245, 4294901760
        %v367 = vsub.f32 %v245, %v366
        %v368 = vand.u32 %v367, 4294901760
        %v369 = vsub.f32 %v367, %v368
        %v370 = vand.u32 %v369, 4294901760
        %371 = vmatpush1.msra.mxu0 %v370
        %372 = vmatprep.subr.mxu0 0.0
        %373 = vmatpush1.msra.mxu0 0.0
        %374 = vmatprep.subr.mxu0 0.0
        %375 = vmatpush1.msra.mxu0 0.0
        %376 = vmatprep.subr.mxu0 0.0
        %377 = vmatpush1.msra.mxu0 0.0
        %378 = vmatprep.subr.mxu0 0.0
        %379 = vmatpush1.msra.mxu0 0.0
        %380 = vmatprep.subr.mxu0 0.0
        %381 = vmatpush1.msra.mxu0 0.0
        %382 = vmatprep.subr.mxu0 0.0
        %383 = vmatpush1.msra.mxu0 0.0
        %384 = vmatprep.subr.mxu0 0.0
        %385 = vmatpush1.msra.mxu0 0.0
        %386 = vmatprep.subr.mxu0 0.0
        %387 = vmatpush1.msra.mxu0 0.0
        %388 = vmatprep.subr.mxu0 0.0
        %389 = vmatpush1.msra.mxu0 0.0
        %390 = vmatprep.subr.mxu0 0.0
        %391 = vmatpush1.msra.mxu0 0.0
        %392 = vmatprep.subr.mxu0 0.0
        %393 = vmatpush1.msra.mxu0 0.0
        %394 = vmatprep.subr.mxu0 0.0
        %395 = vmatpush1.msra.mxu0 0.0
        %396 = vmatprep.subr.mxu0 0.0
        %397 = vmatpush1.msra.mxu0 0.0
        %398 = vmatprep.subr.mxu0 0.0
        %399 = vmatpush1.msra.mxu0 0.0
        %400 = vmatprep.subr.mxu0 0.0
        %401 = vmatpush1.msra.mxu0 0.0
        %402 = vmatprep.subr.mxu0 0.0
        %403 = vmatpush1.msra.mxu0 0.0
        %404 = vmatprep.subr.mxu0 0.0
        %405 = vmatpush1.msra.mxu0 0.0
        %406 = vmatprep.subr.mxu0 0.0
        %407 = vmatpush1.msra.mxu0 0.0
        %408 = vmatprep.subr.mxu0 0.0
        %409 = vmatpush1.msra.mxu0 0.0
        %410 = vmatprep.subr.mxu0 0.0
        %411 = vmatpush1.msra.mxu0 0.0
        %412 = vmatprep.subr.mxu0 0.0
        %413 = vmatpush1.msra.mxu0 0.0
        %414 = vmatprep.subr.mxu0 0.0
        %415 = vmatpush1.msra.mxu0 0.0
        %416 = vmatprep.subr.mxu0 0.0
        %417 = vmatpush1.msra.mxu0 0.0
        %418 = vmatprep.subr.mxu0 0.0
        %419 = vmatpush1.msra.mxu0 0.0
        %420 = vmatprep.subr.mxu0 0.0
        %421 = vmatpush1.msra.mxu0 0.0
        %422 = vmatprep.subr.mxu0 0.0
        %423 = vmatpush1.msra.mxu0 0.0
        %424 = vmatprep.subr.mxu0 0.0
        %425 = vmatpush1.msra.mxu0 0.0
        %426 = vmatprep.subr.mxu0 0.0
        %427 = vmatpush1.msra.mxu0 0.0
        %428 = vmatprep.subr.mxu0 0.0
        %429 = vmatpush1.msra.mxu0 0.0
        %430 = vmatprep.subr.mxu0 0.0
        %431 = vmatpush1.msra.mxu0 0.0
        %432 = vmatprep.subr.mxu0 0.0
        %433 = vmatpush1.msra.mxu0 0.0
        %434 = vmatprep.mubr.f32.mxu0 0.0
        %v435 = vand.u32 %v233, 4294901760
        %436 = vmatmul.mubr.f32.gmra.mrb[0].mxu0 %v435
        %v437 = vpop.f32.mrb[0].mxu0
        %v438 = vadd.f32 %v323, %v437
        %v439 = vpop.f32.mrb[0].mxu0
        %v440 = vadd.f32 %v325, %v439
        %441 = vmatprep.mubr.f32.mxu0 0.0
        %v442 = vand.u32 %v236, 4294901760
        %443 = vmatmul.mubr.f32.gmra.mrb[0].mxu0 %v442
        %v444 = vpop.f32.mrb[0].mxu0
        %v445 = vadd.f32 %v334, %v444
        %v446 = vpop.f32.mrb[0].mxu0
        %v447 = vadd.f32 %v336, %v446
        %448 = vmatprep.mubr.f32.mxu0 0.0
        %v449 = vand.u32 %v239, 4294901760
        %450 = vmatmul.mubr.f32.gmra.mrb[0].mxu0 %v449
        %v451 = vpop.f32.mrb[0].mxu0
        %v452 = vadd.f32 %v345, %v451
        %v453 = vpop.f32.mrb[0].mxu0
        %v454 = vadd.f32 %v347, %v453
        %455 = vmatprep.mubr.f32.mxu0 0.0
        %v456 = vand.u32 %v242, 4294901760
        %457 = vmatmul.mubr.f32.gmra.mrb[0].mxu0 %v456
        %v458 = vpop.f32.mrb[0].mxu0
        %v459 = vadd.f32 %v356, %v458
        %v460 = vpop.f32.mrb[0].mxu0
        %v461 = vadd.f32 %v358, %v460
        %462 = vdwg.mxu0
        %v463 = vand.u32 %v247, 4294901760
        %v464 = vsub.f32 %v247, %v463
        %465 = vmatprep.subr.mxu0 %v464
        %v466 = vand.u32 %v245, 4294901760
        %v467 = vsub.f32 %v245, %v466
        %468 = vmatpush1.msra.mxu0 %v467
        %469 = vmatprep.subr.mxu0 0.0
        %470 = vmatpush1.msra.mxu0 0.0
        %471 = vmatprep.subr.mxu0 0.0
        %472 = vmatpush1.msra.mxu0 0.0
        %473 = vmatprep.subr.mxu0 0.0
        %474 = vmatpush1.msra.mxu0 0.0
        %475 = vmatprep.subr.mxu0 0.0
        %476 = vmatpush1.msra.mxu0 0.0
        %477 = vmatprep.subr.mxu0 0.0
        %478 = vmatpush1.msra.mxu0 0.0
        %479 = vmatprep.subr.mxu0 0.0
        %480 = vmatpush1.msra.mxu0 0.0
        %481 = vmatprep.subr.mxu0 0.0
        %482 = vmatpush1.msra.mxu0 0.0
        %483 = vmatprep.subr.mxu0 0.0
        %484 = vmatpush1.msra.mxu0 0.0
        %485 = vmatprep.subr.mxu0 0.0
        %486 = vmatpush1.msra.mxu0 0.0
        %487 = vmatprep.subr.mxu0 0.0
        %488 = vmatpush1.msra.mxu0 0.0
        %489 = vmatprep.subr.mxu0 0.0
        %490 = vmatpush1.msra.mxu0 0.0
        %491 = vmatprep.subr.mxu0 0.0
        %492 = vmatpush1.msra.mxu0 0.0
        %493 = vmatprep.subr.mxu0 0.0
        %494 = vmatpush1.msra.mxu0 0.0
        %495 = vmatprep.subr.mxu0 0.0
        %496 = vmatpush1.msra.mxu0 0.0
        %497 = vmatprep.subr.mxu0 0.0
        %498 = vmatpush1.msra.mxu0 0.0
        %499 = vmatprep.subr.mxu0 0.0
        %500 = vmatpush1.msra.mxu0 0.0
        %501 = vmatprep.subr.mxu0 0.0
        %502 = vmatpush1.msra.mxu0 0.0
        %503 = vmatprep.subr.mxu0 0.0
        %504 = vmatpush1.msra.mxu0 0.0
        %505 = vmatprep.subr.mxu0 0.0
        %506 = vmatpush1.msra.mxu0 0.0
        %507 = vmatprep.subr.mxu0 0.0
        %508 = vmatpush1.msra.mxu0 0.0
        %509 = vmatprep.subr.mxu0 0.0
        %510 = vmatpush1.msra.mxu0 0.0
        %511 = vmatprep.subr.mxu0 0.0
        %512 = vmatpush1.msra.mxu0 0.0
        %513 = vmatprep.subr.mxu0 0.0
        %514 = vmatpush1.msra.mxu0 0.0
        %515 = vmatprep.subr.mxu0 0.0
        %516 = vmatpush1.msra.mxu0 0.0
        %517 = vmatprep.subr.mxu0 0.0
        %518 = vmatpush1.msra.mxu0 0.0
        %519 = vmatprep.subr.mxu0 0.0
        %520 = vmatpush1.msra.mxu0 0.0
        %521 = vmatprep.subr.mxu0 0.0
        %522 = vmatpush1.msra.mxu0 0.0
        %523 = vmatprep.subr.mxu0 0.0
        %524 = vmatpush1.msra.mxu0 0.0
        %525 = vmatprep.subr.mxu0 0.0
        %526 = vmatpush1.msra.mxu0 0.0
        %527 = vmatprep.subr.mxu0 0.0
        %528 = vmatpush1.msra.mxu0 0.0
        %529 = vmatprep.subr.mxu0 0.0
        %530 = vmatpush1.msra.mxu0 0.0
        %531 = vmatprep.mubr.f32.mxu0 0.0
        %v532 = vand.u32 %v233, 4294901760
        %v533 = vsub.f32 %v233, %v532
        %534 = vmatmul.mubr.f32.gmra.mrb[0].mxu0 %v533
        %v535 = vpop.f32.mrb[0].mxu0
        %v536 = vadd.f32 %v438, %v535
        %v537 = vpop.f32.mrb[0].mxu0
        %v538 = vadd.f32 %v440, %v537
        %539 = vmatprep.mubr.f32.mxu0 0.0
        %v540 = vand.u32 %v236, 4294901760
        %v541 = vsub.f32 %v236, %v540
        %542 = vmatmul.mubr.f32.gmra.mrb[0].mxu0 %v541
        %v543 = vpop.f32.mrb[0].mxu0
        %v544 = vadd.f32 %v445, %v543
        %v545 = vpop.f32.mrb[0].mxu0
        %v546 = vadd.f32 %v447, %v545
        %547 = vmatprep.mubr.f32.mxu0 0.0
        %v548 = vand.u32 %v239, 4294901760
        %v549 = vsub.f32 %v239, %v548
        %550 = vmatmul.mubr.f32.gmra.mrb[0].mxu0 %v549
        %v551 = vpop.f32.mrb[0].mxu0
        %v552 = vadd.f32 %v452, %v551
        %v553 = vpop.f32.mrb[0].mxu0
        %v554 = vadd.f32 %v454, %v553
        %555 = vmatprep.mubr.f32.mxu0 0.0
        %v556 = vand.u32 %v242, 4294901760
        %v557 = vsub.f32 %v242, %v556
        %558 = vmatmul.mubr.f32.gmra.mrb[0].mxu0 %v557
        %v559 = vpop.f32.mrb[0].mxu0
        %v560 = vadd.f32 %v459, %v559
        %v561 = vpop.f32.mrb[0].mxu0
        %v562 = vadd.f32 %v461, %v561
        %563 = vdwg.mxu0
        %v564 = vand.u32 %v247, 4294901760
        %565 = vmatprep.subr.mxu0 %v564
        %v566 = vand.u32 %v245, 4294901760
        %567 = vmatpush1.msra.mxu0 %v566
        %568 = vmatprep.subr.mxu0 0.0
        %569 = vmatpush1.msra.mxu0 0.0
        %570 = vmatprep.subr.mxu0 0.0
        %571 = vmatpush1.msra.mxu0 0.0
        %572 = vmatprep.subr.mxu0 0.0
        %573 = vmatpush1.msra.mxu0 0.0
        %574 = vmatprep.subr.mxu0 0.0
        %575 = vmatpush1.msra.mxu0 0.0
        %576 = vmatprep.subr.mxu0 0.0
        %577 = vmatpush1.msra.mxu0 0.0
        %578 = vmatprep.subr.mxu0 0.0
        %579 = vmatpush1.msra.mxu0 0.0
        %580 = vmatprep.subr.mxu0 0.0
        %581 = vmatpush1.msra.mxu0 0.0
        %582 = vmatprep.subr.mxu0 0.0
        %583 = vmatpush1.msra.mxu0 0.0
        %584 = vmatprep.subr.mxu0 0.0
        %585 = vmatpush1.msra.mxu0 0.0
        %586 = vmatprep.subr.mxu0 0.0
        %587 = vmatpush1.msra.mxu0 0.0
        %588 = vmatprep.subr.mxu0 0.0
        %589 = vmatpush1.msra.mxu0 0.0
        %590 = vmatprep.subr.mxu0 0.0
        %591 = vmatpush1.msra.mxu0 0.0
        %592 = vmatprep.subr.mxu0 0.0
        %593 = vmatpush1.msra.mxu0 0.0
        %594 = vmatprep.subr.mxu0 0.0
        %595 = vmatpush1.msra.mxu0 0.0
        %596 = vmatprep.subr.mxu0 0.0
        %597 = vmatpush1.msra.mxu0 0.0
        %598 = vmatprep.subr.mxu0 0.0
        %599 = vmatpush1.msra.mxu0 0.0
        %600 = vmatprep.subr.mxu0 0.0
        %601 = vmatpush1.msra.mxu0 0.0
        %602 = vmatprep.subr.mxu0 0.0
        %603 = vmatpush1.msra.mxu0 0.0
        %604 = vmatprep.subr.mxu0 0.0
        %605 = vmatpush1.msra.mxu0 0.0
        %606 = vmatprep.subr.mxu0 0.0
        %607 = vmatpush1.msra.mxu0 0.0
        %608 = vmatprep.subr.mxu0 0.0
        %609 = vmatpush1.msra.mxu0 0.0
        %610 = vmatprep.subr.mxu0 0.0
        %611 = vmatpush1.msra.mxu0 0.0
        %612 = vmatprep.subr.mxu0 0.0
        %613 = vmatpush1.msra.mxu0 0.0
        %614 = vmatprep.subr.mxu0 0.0
        %615 = vmatpush1.msra.mxu0 0.0
        %616 = vmatprep.subr.mxu0 0.0
        %617 = vmatpush1.msra.mxu0 0.0
        %618 = vmatprep.subr.mxu0 0.0
        %619 = vmatpush1.msra.mxu0 0.0
        %620 = vmatprep.subr.mxu0 0.0
        %621 = vmatpush1.msra.mxu0 0.0
        %622 = vmatprep.subr.mxu0 0.0
        %623 = vmatpush1.msra.mxu0 0.0
        %624 = vmatprep.subr.mxu0 0.0
        %625 = vmatpush1.msra.mxu0 0.0
        %626 = vmatprep.subr.mxu0 0.0
        %627 = vmatpush1.msra.mxu0 0.0
        %628 = vmatprep.subr.mxu0 0.0
        %629 = vmatpush1.msra.mxu0 0.0
        %630 = vmatprep.mubr.f32.mxu0 0.0
        %v631 = vand.u32 %v233, 4294901760
        %v632 = vsub.f32 %v233, %v631
        %v633 = vand.u32 %v632, 4294901760
        %634 = vmatmul.mubr.f32.gmra.mrb[0].mxu0 %v633
        %v635 = vpop.f32.mrb[0].mxu0
        %v636 = vadd.f32 %v536, %v635
        %v637 = vpop.f32.mrb[0].mxu0
        %v638 = vadd.f32 %v538, %v637
        %639 = vmatprep.mubr.f32.mxu0 0.0
        %v640 = vand.u32 %v236, 4294901760
        %v641 = vsub.f32 %v236, %v640
        %v642 = vand.u32 %v641, 4294901760
        %643 = vmatmul.mubr.f32.gmra.mrb[0].mxu0 %v642
        %v644 = vpop.f32.mrb[0].mxu0
        %v645 = vadd.f32 %v544, %v644
        %v646 = vpop.f32.mrb[0].mxu0
        %v647 = vadd.f32 %v546, %v646
        %648 = vmatprep.mubr.f32.mxu0 0.0
        %v649 = vand.u32 %v239, 4294901760
        %v650 = vsub.f32 %v239, %v649
        %v651 = vand.u32 %v650, 4294901760
        %652 = vmatmul.mubr.f32.gmra.mrb[0].mxu0 %v651
        %v653 = vpop.f32.mrb[0].mxu0
        %v654 = vadd.f32 %v552, %v653
        %v655 = vpop.f32.mrb[0].mxu0
        %v656 = vadd.f32 %v554, %v655
        %657 = vmatprep.mubr.f32.mxu0 0.0
        %v658 = vand.u32 %v242, 4294901760
        %v659 = vsub.f32 %v242, %v658
        %v660 = vand.u32 %v659, 4294901760
        %661 = vmatmul.mubr.f32.gmra.mrb[0].mxu0 %v660
        %v662 = vpop.f32.mrb[0].mxu0
        %v663 = vadd.f32 %v560, %v662
        %v664 = vpop.f32.mrb[0].mxu0
        %v665 = vadd.f32 %v562, %v664
        %666 = vdwg.mxu0
        %v667 = vand.u32 %v247, 4294901760
        %v668 = vsub.f32 %v247, %v667
        %v669 = vand.u32 %v668, 4294901760
        %670 = vmatprep.subr.mxu0 %v669
        %v671 = vand.u32 %v245, 4294901760
        %v672 = vsub.f32 %v245, %v671
        %v673 = vand.u32 %v672, 4294901760
        %674 = vmatpush1.msra.mxu0 %v673
        %675 = vmatprep.subr.mxu0 0.0
        %676 = vmatpush1.msra.mxu0 0.0
        %677 = vmatprep.subr.mxu0 0.0
        %678 = vmatpush1.msra.mxu0 0.0
        %679 = vmatprep.subr.mxu0 0.0
        %680 = vmatpush1.msra.mxu0 0.0
        %681 = vmatprep.subr.mxu0 0.0
        %682 = vmatpush1.msra.mxu0 0.0
        %683 = vmatprep.subr.mxu0 0.0
        %684 = vmatpush1.msra.mxu0 0.0
        %685 = vmatprep.subr.mxu0 0.0
        %686 = vmatpush1.msra.mxu0 0.0
        %687 = vmatprep.subr.mxu0 0.0
        %688 = vmatpush1.msra.mxu0 0.0
        %689 = vmatprep.subr.mxu0 0.0
        %690 = vmatpush1.msra.mxu0 0.0
        %691 = vmatprep.subr.mxu0 0.0
        %692 = vmatpush1.msra.mxu0 0.0
        %693 = vmatprep.subr.mxu0 0.0
        %694 = vmatpush1.msra.mxu0 0.0
        %695 = vmatprep.subr.mxu0 0.0
        %696 = vmatpush1.msra.mxu0 0.0
        %697 = vmatprep.subr.mxu0 0.0
        %698 = vmatpush1.msra.mxu0 0.0
        %699 = vmatprep.subr.mxu0 0.0
        %700 = vmatpush1.msra.mxu0 0.0
        %701 = vmatprep.subr.mxu0 0.0
        %702 = vmatpush1.msra.mxu0 0.0
        %703 = vmatprep.subr.mxu0 0.0
        %704 = vmatpush1.msra.mxu0 0.0
        %705 = vmatprep.subr.mxu0 0.0
        %706 = vmatpush1.msra.mxu0 0.0
        %707 = vmatprep.subr.mxu0 0.0
        %708 = vmatpush1.msra.mxu0 0.0
        %709 = vmatprep.subr.mxu0 0.0
        %710 = vmatpush1.msra.mxu0 0.0
        %711 = vmatprep.subr.mxu0 0.0
        %712 = vmatpush1.msra.mxu0 0.0
        %713 = vmatprep.subr.mxu0 0.0
        %714 = vmatpush1.msra.mxu0 0.0
        %715 = vmatprep.subr.mxu0 0.0
        %716 = vmatpush1.msra.mxu0 0.0
        %717 = vmatprep.subr.mxu0 0.0
        %718 = vmatpush1.msra.mxu0 0.0
        %719 = vmatprep.subr.mxu0 0.0
        %720 = vmatpush1.msra.mxu0 0.0
        %721 = vmatprep.subr.mxu0 0.0
        %722 = vmatpush1.msra.mxu0 0.0
        %723 = vmatprep.subr.mxu0 0.0
        %724 = vmatpush1.msra.mxu0 0.0
        %725 = vmatprep.subr.mxu0 0.0
        %726 = vmatpush1.msra.mxu0 0.0
        %727 = vmatprep.subr.mxu0 0.0
        %728 = vmatpush1.msra.mxu0 0.0
        %729 = vmatprep.subr.mxu0 0.0
        %730 = vmatpush1.msra.mxu0 0.0
        %731 = vmatprep.subr.mxu0 0.0
        %732 = vmatpush1.msra.mxu0 0.0
        %733 = vmatprep.subr.mxu0 0.0
        %734 = vmatpush1.msra.mxu0 0.0
        %735 = vmatprep.subr.mxu0 0.0
        %736 = vmatpush1.msra.mxu0 0.0
        %737 = vmatprep.mubr.f32.mxu0 0.0
        %v738 = vand.u32 %v233, 4294901760
        %739 = vmatmul.mubr.f32.gmra.mrb[0].mxu0 %v738
        %v740 = vpop.f32.mrb[0].mxu0
        %v741 = vadd.f32 %v636, %v740
        %v742 = vpop.f32.mrb[0].mxu0
        %v743 = vadd.f32 %v638, %v742
        %744 = vmatprep.mubr.f32.mxu0 0.0
        %v745 = vand.u32 %v236, 4294901760
        %746 = vmatmul.mubr.f32.gmra.mrb[0].mxu0 %v745
        %v747 = vpop.f32.mrb[0].mxu0
        %v748 = vadd.f32 %v645, %v747
        %v749 = vpop.f32.mrb[0].mxu0
        %v750 = vadd.f32 %v647, %v749
        %751 = vmatprep.mubr.f32.mxu0 0.0
        %v752 = vand.u32 %v239, 4294901760
        %753 = vmatmul.mubr.f32.gmra.mrb[0].mxu0 %v752
        %v754 = vpop.f32.mrb[0].mxu0
        %v755 = vadd.f32 %v654, %v754
        %v756 = vpop.f32.mrb[0].mxu0
        %v757 = vadd.f32 %v656, %v756
        %758 = vmatprep.mubr.f32.mxu0 0.0
        %v759 = vand.u32 %v242, 4294901760
        %760 = vmatmul.mubr.f32.gmra.mrb[0].mxu0 %v759
        %v761 = vpop.f32.mrb[0].mxu0
        %v762 = vadd.f32 %v663, %v761
        %v763 = vpop.f32.mrb[0].mxu0
        %v764 = vadd.f32 %v665, %v763
        %765 = vdwg.mxu0
        %v766 = vand.u32 %v247, 4294901760
        %767 = vmatprep.subr.mxu0 %v766
        %v768 = vand.u32 %v245, 4294901760
        %769 = vmatpush1.msra.mxu0 %v768
        %770 = vmatprep.subr.mxu0 0.0
        %771 = vmatpush1.msra.mxu0 0.0
        %772 = vmatprep.subr.mxu0 0.0
        %773 = vmatpush1.msra.mxu0 0.0
        %774 = vmatprep.subr.mxu0 0.0
        %775 = vmatpush1.msra.mxu0 0.0
        %776 = vmatprep.subr.mxu0 0.0
        %777 = vmatpush1.msra.mxu0 0.0
        %778 = vmatprep.subr.mxu0 0.0
        %779 = vmatpush1.msra.mxu0 0.0
        %780 = vmatprep.subr.mxu0 0.0
        %781 = vmatpush1.msra.mxu0 0.0
        %782 = vmatprep.subr.mxu0 0.0
        %783 = vmatpush1.msra.mxu0 0.0
        %784 = vmatprep.subr.mxu0 0.0
        %785 = vmatpush1.msra.mxu0 0.0
        %786 = vmatprep.subr.mxu0 0.0
        %787 = vmatpush1.msra.mxu0 0.0
        %788 = vmatprep.subr.mxu0 0.0
        %789 = vmatpush1.msra.mxu0 0.0
        %790 = vmatprep.subr.mxu0 0.0
        %791 = vmatpush1.msra.mxu0 0.0
        %792 = vmatprep.subr.mxu0 0.0
        %793 = vmatpush1.msra.mxu0 0.0
        %794 = vmatprep.subr.mxu0 0.0
        %795 = vmatpush1.msra.mxu0 0.0
        %796 = vmatprep.subr.mxu0 0.0
        %797 = vmatpush1.msra.mxu0 0.0
        %798 = vmatprep.subr.mxu0 0.0
        %799 = vmatpush1.msra.mxu0 0.0
        %800 = vmatprep.subr.mxu0 0.0
        %801 = vmatpush1.msra.mxu0 0.0
        %802 = vmatprep.subr.mxu0 0.0
        %803 = vmatpush1.msra.mxu0 0.0
        %804 = vmatprep.subr.mxu0 0.0
        %805 = vmatpush1.msra.mxu0 0.0
        %806 = vmatprep.subr.mxu0 0.0
        %807 = vmatpush1.msra.mxu0 0.0
        %808 = vmatprep.subr.mxu0 0.0
        %809 = vmatpush1.msra.mxu0 0.0
        %810 = vmatprep.subr.mxu0 0.0
        %811 = vmatpush1.msra.mxu0 0.0
        %812 = vmatprep.subr.mxu0 0.0
        %813 = vmatpush1.msra.mxu0 0.0
        %814 = vmatprep.subr.mxu0 0.0
        %815 = vmatpush1.msra.mxu0 0.0
        %816 = vmatprep.subr.mxu0 0.0
        %817 = vmatpush1.msra.mxu0 0.0
        %818 = vmatprep.subr.mxu0 0.0
        %819 = vmatpush1.msra.mxu0 0.0
        %820 = vmatprep.subr.mxu0 0.0
        %821 = vmatpush1.msra.mxu0 0.0
        %822 = vmatprep.subr.mxu0 0.0
        %823 = vmatpush1.msra.mxu0 0.0
        %824 = vmatprep.subr.mxu0 0.0
        %825 = vmatpush1.msra.mxu0 0.0
        %826 = vmatprep.subr.mxu0 0.0
        %827 = vmatpush1.msra.mxu0 0.0
        %828 = vmatprep.subr.mxu0 0.0
        %829 = vmatpush1.msra.mxu0 0.0
        %830 = vmatprep.subr.mxu0 0.0
        %831 = vmatpush1.msra.mxu0 0.0
        %832 = vmatprep.mubr.f32.mxu0 0.0
        %v833 = vand.u32 %v233, 4294901760
        %834 = vmatmul.mubr.f32.gmra.mrb[0].mxu0 %v833
        %v835 = vpop.f32.mrb[0].mxu0
        %v836 = vadd.f32 %v741, %v835
        %v837 = vpop.f32.mrb[0].mxu0
        %v838 = vadd.f32 %v743, %v837
        %839 = vmatprep.mubr.f32.mxu0 0.0
        %v840 = vand.u32 %v236, 4294901760
        %841 = vmatmul.mubr.f32.gmra.mrb[0].mxu0 %v840
        %v842 = vpop.f32.mrb[0].mxu0
        %v843 = vadd.f32 %v748, %v842
        %v844 = vpop.f32.mrb[0].mxu0
        %v845 = vadd.f32 %v750, %v844
        %846 = vmatprep.mubr.f32.mxu0 0.0
        %v847 = vand.u32 %v239, 4294901760
        %848 = vmatmul.mubr.f32.gmra.mrb[0].mxu0 %v847
        %v849 = vpop.f32.mrb[0].mxu0
        %v850 = vadd.f32 %v755, %v849
        %v851 = vpop.f32.mrb[0].mxu0
        %v852 = vadd.f32 %v757, %v851
        %853 = vmatprep.mubr.f32.mxu0 0.0
        %v854 = vand.u32 %v242, 4294901760
        %855 = vmatmul.mubr.f32.gmra.mrb[0].mxu0 %v854
        %v856 = vpop.f32.mrb[0].mxu0
        %v857 = vadd.f32 %v762, %v856
        %v858 = vpop.f32.mrb[0].mxu0
        %v859 = vadd.f32 %v764, %v858
        %860 = vdwg.mxu0
        %v861 = vmax.f32 %v836, 0.0
        %v862 = vmax.f32 %v838, 0.0
        %v863 = vmax.f32 %v843, 0.0
        %v864 = vmax.f32 %v845, 0.0
        %v865 = vmax.f32 %v850, 0.0
        %v866 = vmax.f32 %v852, 0.0
        %v867 = vmax.f32 %v857, 0.0
        %v868 = vmax.f32 %v859, 0.0
        %869 = vst [vmem:[%s188] sm:$0xff] %v861
        %870 = vst [vmem:[%s188 + $0x8] sm:$0xff] %v862
        %871 = vst [vmem:[%s188 + $0x10] sm:$0xff] %v863
        %872 = vst [vmem:[%s188 + $0x18] sm:$0xff] %v864
        %873 = vst [vmem:[%s188 + $0x20] sm:$0xff] %v865
        %874 = vst [vmem:[%s188 + $0x28] sm:$0xff] %v866
        %875 = vst [vmem:[%s188 + $0x30] sm:$0xff] %v867
        %876 = vst [vmem:[%s188 + $0x38] sm:$0xff] %v868
        %s877 = sand.u32 %s109, 1
        %s878 = scalar_lea.sflag [#allocation3], %s877
        %s879 = sand.u32 %s109, 1
        %s880 = smul.addr %s879, 64
        %s881 = scalar_lea.vmem [#allocation2], %s880
        // Predicated region
        $region33: #{tpu_custom_call.1} parent=31 // pred_check
          %p882 = pneg %p119
        $region34: #{tpu_custom_call.1} parent=31 // pred_check_branch
          %884 = sbr.rel (%p882) target = $region36
        $region35: #{tpu_custom_call.1} parent=31 // pred_region
          %s885 = smul.u32 2, %s22
          %s887 = ssub.s32 1024, 1024
          %888 = vsyncadd %s878, %s887
          %s889 = smul.addr %s21, 8
          %s890 = sadd.s32 %s885, %s889
          %s891 = smul.addr %s890, 128
          %s892 = scalar_lea.hbm %s3, %s891
          %s893 = sshll.u32 %s881, 4
          %s894 = int_to_ptr.vmem [resolvable:$true] %s893
          %899 = dma.vmem_to_hbm [thread:$0]  %s894, 1024, %s892, %s878, 256, 256, 16
        $region36: #{tpu_custom_call.1} parent=31 // pred_fallthru
          _
      $region32: #{tpu_custom_call.1} parent=5 // pred_fallthru
        _
      %p900 = scmp.le.s32.totalorder 2, %s12
      // Predicated region
      $region37: #{tpu_custom_call.1} parent=5 // pred_check
        %p901 = pneg %p900
      $region38: #{tpu_custom_call.1} parent=5 // pred_check_branch
        %903 = sbr.rel (%p901) target = $region40
      $region39: #{tpu_custom_call.1} parent=5 // pred_region
        %s904 = ssub.s32 %s12, 2
        // Predicated region
        $region41: #{tpu_custom_call.1} parent=39 // pred_check
          %p905 = pneg %p125
        $region42: #{tpu_custom_call.1} parent=39 // pred_check_branch
          %907 = sbr.rel (%p905) target = $region44
        $region43: #{tpu_custom_call.1} parent=39 // pred_region
          %s908 = sand.u32 %s110, 1
          %s909 = scalar_lea.sflag [#allocation3], %s908
          %s910 = sand.u32 %s110, 1
          %s911 = smul.addr %s910, 64
          %s912 = scalar_lea.vmem [#allocation2], %s911
          %913 = dma.done %s909, 1024
        $region44: #{tpu_custom_call.1} parent=39 // pred_fallthru
          _
      $region40: #{tpu_custom_call.1} parent=5 // pred_fallthru
        _
    $region6: #{tpu_custom_call.1} parent=1 // loop_footer
      %s16 = sadd.s32 1, %s12
    $region7: #{tpu_custom_call.1} parent=1 // loop_footer_branch
      %11 = sbr.rel target = $region3
    $region8: #{tpu_custom_call.1} parent=1 // loop_exit
      _
    %914 = vsyncpa [#allocation3], 1
    %s915 = scalar_lea.sflag [#allocation3], 1
    %916 = vsyncpa %s915, 1

</llo_original>
